<compile_context>
chip_gen: v5e
topology: v5e:2x2
jax: 0.10.0
libtpu: 0.0.40
codegen_flags: <defaults>
</compile_context>

<pallas_src>
import functools

import numpy as np
import jax
import jax.numpy as jnp
from jax import lax
from jax.experimental import pallas as pl
from jax.experimental.pallas import tpu as pltpu

_EPS = 1e-5
_SUBLANE = 8  # f32 sublane tile; channel counts padded to a multiple of this


# ---------------------------------------------------------------------------
# Fused Pallas kernel
#   one matmul: [conv1(3x3)+bn1 ; 1x1 shortcut conv+bn]   (stacked LHS)
#   relu, then conv2(3x3)+bn2, residual add, final relu
# ---------------------------------------------------------------------------

def _basic_block_kernel(x_ref, w1s_ref, w2_ref, b1s_ref, b2_ref, m_ref,
                        o_ref, patch_ref, *, W, cp_in, c_out, lanes):
    x = x_ref[...]                                        # (cp_in, lanes)

    def build_patches(a, C):
        """Write 3x3 im2col patches of `a` (C, lanes) into patch_ref rows [0, 9*C)."""
        for kh in range(3):
            for kw in range(3):
                dh, dw = kh - 1, kw - 1
                s = dh * W + dw                           # flat spatial shift of this tap
                t = kh * 3 + kw
                shifted = a if s == 0 else pltpu.roll(a, (-s) % lanes, axis=1)
                if dh == 0 and dw == 0:
                    patch_ref[t * C:(t + 1) * C, :] = shifted      # centre tap: always valid
                else:
                    m_t = m_ref[t]                        # (cmax, lanes), pre-broadcast mask
                    if m_t.shape[0] != C:
                        m_t = m_t[:C]
                    patch_ref[t * C:(t + 1) * C, :] = shifted * m_t

    # conv1(3x3)+bn1 and the 1x1 shortcut conv+bn fused into ONE matmul (M = 2*Cout).
    build_patches(x, cp_in)
    y = jnp.dot(w1s_ref[...], patch_ref[:9 * cp_in, :],
                preferred_element_type=jnp.float32) + b1s_ref[...]
    y1 = jnp.maximum(y[:c_out], 0.0)                      # conv1 + bn1 + relu
    res = y[c_out:]                                       # shortcut conv + bn

    # conv2(3x3)+bn2 + residual add + final relu (lane-dense (Cout, lanes) store).
    build_patches(y1, c_out)
    y2 = jnp.dot(w2_ref[...], patch_ref[:9 * c_out, :],
                 preferred_element_type=jnp.float32) + b2_ref[...]
    o_ref[...] = jnp.maximum(y2 + res, 0.0)


# ---------------------------------------------------------------------------
# One-time prep (weights, BN fold, masks) + jitted forward factory
# ---------------------------------------------------------------------------

def _fold_bn(gamma, beta, mean, var):
    scale = gamma / jnp.sqrt(var + _EPS)
    return scale, beta - mean * scale


def _prep_w3x3(w_oihw, scale, c_pad):
    """OIHW (O,I,3,3) -> BN-scale-folded (O, 9*c_pad), tap-major / channel-minor."""
    O, I = w_oihw.shape[0], w_oihw.shape[1]
    w = jnp.pad(w_oihw, ((0, 0), (0, c_pad - I), (0, 0), (0, 0)))
    w = jnp.transpose(w, (0, 2, 3, 1)).reshape(O, 9 * c_pad)
    return w * scale[:, None]


def _tap_masks(H, W, C, reps):
    """(9, C, reps*H*W) 0/1 masks: tap validity per pixel, tiled per image, broadcast
    to C sublane rows so the kernel multiplies whole vregs (no in-kernel broadcast)."""
    hh, ww = np.meshgrid(np.arange(H), np.arange(W), indexing="ij")
    hh, ww = hh.reshape(-1), ww.reshape(-1)
    m = np.zeros((9, H * W), np.float32)
    for kh in range(3):
        for kw in range(3):
            dh, dw = kh - 1, kw - 1
            valid = (hh + dh >= 0) & (hh + dh < H) & (ww + dw >= 0) & (ww + dw < W)
            m[kh * 3 + kw] = valid
    m = np.tile(m, (1, reps))                                   # per-image period = HW
    m = np.ascontiguousarray(np.broadcast_to(m[:, None, :], (9, C, reps * H * W)))
    return m


def _num_tensorcores_per_chip():
    try:
        kind = jax.devices()[0].device_kind.lower()
    except Exception:
        return 1
    return 2 if ("v7" in kind or "7x" in kind) else 1


def _choose_groups(N):
    g = min(N, max(1, _num_tensorcores_per_chip()))
    while g > 1 and N % g:
        g -= 1
    return g


def make_basic_block_do(params, N, H, W, n_groups=None):
    """One-time weight/BN/mask prep; returns a jitted forward(x_nchw)->(N,Cout,H,W)."""
    c_out, c_in = params['w1_oihw'].shape[0], params['w1_oihw'].shape[1]
    assert c_out % _SUBLANE == 0, "Cout must be a multiple of 8 for aligned im2col"
    cp_in = -(-c_in // _SUBLANE) * _SUBLANE
    cmax = max(cp_in, c_out)
    HW = H * W

    G = _choose_groups(N) if n_groups is None else n_groups
    assert N % G == 0
    lanes = (N // G) * HW
    if G > 1:
        assert lanes % 128 == 0, "per-group lane width must be a multiple of 128"

    # Fold BN into conv weights / shifts (eval mode).
    s1, b1 = _fold_bn(*params['bn1'])
    s2, b2 = _fold_bn(*params['bn2'])
    sd, bd = _fold_bn(*params['bnd'])

    w1 = _prep_w3x3(params['w1_oihw'], s1, cp_in)               # (Cout, 9*cp_in)
    # 1x1 shortcut weights embedded at the centre-tap columns, stacked under w1.
    wd = jnp.pad(params['wd_oihw'].reshape(c_out, c_in),
                 ((0, 0), (0, cp_in - c_in))) * sd[:, None]
    wd_full = jnp.zeros((c_out, 9 * cp_in), jnp.float32)
    wd_full = wd_full.at[:, 4 * cp_in:5 * cp_in].set(wd)
    w1s = jnp.concatenate([w1, wd_full], axis=0)                # (2*Cout, 9*cp_in)
    b1s = jnp.concatenate([b1, bd])[:, None]                    # (2*Cout, 1)

    w2 = _prep_w3x3(params['w2_oihw'], s2, c_out)               # (Cout, 9*Cout)
    b2c = b2[:, None]

    masks = jnp.asarray(_tap_masks(H, W, cmax, N // G))         # (9, cmax, lanes)

    kernel = functools.partial(_basic_block_kernel, W=W,
                               cp_in=cp_in, c_out=c_out, lanes=lanes)

    call = pl.pallas_call(
        kernel,
        out_shape=jax.ShapeDtypeStruct((c_out, N * HW), jnp.float32),
        grid=(G,),
        in_specs=[
            pl.BlockSpec((cp_in, lanes), lambda g: (0, g)),           # x (per group)
            pl.BlockSpec((2 * c_out, 9 * cp_in), lambda g: (0, 0)),   # w1 + shortcut
            pl.BlockSpec((c_out, 9 * c_out), lambda g: (0, 0)),       # w2
            pl.BlockSpec((2 * c_out, 1), lambda g: (0, 0)),           # bn1/bnd shifts
            pl.BlockSpec((c_out, 1), lambda g: (0, 0)),               # bn2 shift
            pl.BlockSpec((9, cmax, lanes), lambda g: (0, 0, 0)),      # tap masks
        ],
        out_specs=pl.BlockSpec((c_out, lanes), lambda g: (0, g)),
        scratch_shapes=[pltpu.VMEM((9 * cmax, lanes), jnp.float32)],  # im2col operand
        compiler_params=pltpu.CompilerParams(dimension_semantics=("parallel",)),
    )

    # TODO(synk): stride-2 (is_downsample=True) variant is not implemented; the
    # roll+mask im2col here is only valid for stride-1 / pad-1 3x3 convs.

    @jax.jit
    def forward(x_nchw):
        # NCHW -> channel-padded (cp_in, N*HW): image n occupies lanes [n*HW,(n+1)*HW).
        x = x_nchw.astype(jnp.float32).reshape(N, c_in, HW)
        x = jnp.pad(x, ((0, 0), (0, cp_in - c_in), (0, 0)))
        x = jnp.transpose(x, (1, 0, 2)).reshape(cp_in, N * HW)
        out = call(x, w1s, w2, b1s, b2c, masks)
        return out.reshape(c_out, N, HW).transpose(1, 0, 2).reshape(N, c_out, H, W)

    return forward


# ---------------------------------------------------------------------------
# Parameter construction (deterministic, synthetic)
# ---------------------------------------------------------------------------

def do_conv_weight(key, c_in, c_out, k):
    """DOConv2d effective weight: DoW = einsum('ims,ois->oim', D, W) -> OIHW."""
    d_mul = k * k
    k_w, k_d = jax.random.split(key)
    Wp = 0.1 * jax.random.normal(k_w, (c_out, c_in, d_mul), jnp.float32)
    d_diag = jnp.tile(jnp.eye(d_mul, dtype=jnp.float32)[None], (c_in, 1, 1))
    Dp = d_diag + 0.05 * jax.random.normal(k_d, (c_in, d_mul, d_mul), jnp.float32)
    dow = jnp.einsum('ims,ois->oim', Dp, Wp)            # (c_out, c_in, k*k)
    return dow.reshape(c_out, c_in, k, k)               # OIHW


def bn_params(key, c):
    kg, kb, km, kv = jax.random.split(key, 4)
    gamma = 1.0 + 0.1 * jax.random.normal(kg, (c,), jnp.float32)
    beta = 0.1 * jax.random.normal(kb, (c,), jnp.float32)
    mean = 0.1 * jax.random.normal(km, (c,), jnp.float32)
    var = jnp.abs(jax.random.normal(kv, (c,), jnp.float32)) + 0.5
    return gamma, beta, mean, var


# ---------------------------------------------------------------------------
# Pure-JAX reference (BatchNorm eval mode)
# ---------------------------------------------------------------------------

def basic_block_do_ref(x, p):
    def conv(x, w_oihw, stride, pad):
        return lax.conv_general_dilated(
            x, w_oihw, (stride, stride), [(pad, pad), (pad, pad)],
            dimension_numbers=('NCHW', 'OIHW', 'NCHW'))

    def bn(x, params):
        gamma, beta, mean, var = params
        r = lambda v: v.reshape(1, -1, 1, 1)
        return r(gamma) * (x - r(mean)) / jnp.sqrt(r(var) + _EPS) + r(beta)

    y = jnp.maximum(bn(conv(x, p['w1_oihw'], 1, 1), p['bn1']), 0.0)
    y = bn(conv(y, p['w2_oihw'], 1, 1), p['bn2'])
    xr = bn(conv(x, p['wd_oihw'], 1, 0), p['bnd'])
    return jnp.maximum(xr + y, 0.0)


# ---------------------------------------------------------------------------

if __name__ == "__main__":
    C_IN, C_OUT, N, H, W = 4, 8, 2, 16, 16

    key = jax.random.PRNGKey(0)
    kx, k1, k2, kd, kb1, kb2, kbd = jax.random.split(key, 7)

    params = {
        'w1_oihw': do_conv_weight(k1, C_IN, C_OUT, 3),
        'w2_oihw': do_conv_weight(k2, C_OUT, C_OUT, 3),
        'wd_oihw': do_conv_weight(kd, C_IN, C_OUT, 1),
        'bn1': bn_params(kb1, C_OUT),
        'bn2': bn_params(kb2, C_OUT),
        'bnd': bn_params(kbd, C_OUT),
    }

    x = jax.random.normal(kx, (N, C_IN, H, W), jnp.float32)

    forward = make_basic_block_do(params, N, H, W)   # one-time prep (hoisted)
    out = jax.block_until_ready(forward(x))

    ref = basic_block_do_ref(x, params)
    assert out.shape == (N, C_OUT, H, W)
    assert jnp.allclose(out, ref, atol=1e-4, rtol=1e-4), "mismatch vs JAX reference"

    print("KERNEL_OK")
</pallas_src>

<mosaic_0001>
module attributes {stable_mosaic.version = 11 : i64} {
  func.func @_basic_block_kernel(%arg0: i32, %arg1: memref<8x512xf32, #tpu.memory_space<vmem>>, %arg2: memref<16x72xf32, #tpu.memory_space<vmem>>, %arg3: memref<8x72xf32, #tpu.memory_space<vmem>>, %arg4: memref<16x1xf32, #tpu.memory_space<vmem>>, %arg5: memref<8x1xf32, #tpu.memory_space<vmem>>, %arg6: memref<9x8x512xf32, #tpu.memory_space<vmem>>, %arg7: memref<8x512xf32, #tpu.memory_space<vmem>>, %arg8: memref<72x512xf32, #tpu.memory_space<vmem>>) attributes {dimension_semantics = [#tpu.dimension_semantics<parallel>], iteration_bounds = array<i64: 1>, scalar_prefetch = 0 : i64, scratch_operands = 1 : i64, tpu.core_type = #tpu.core_type<tc>, window_params = [{transform_indices = @transform_0, window_bounds = array<i64: 8, 512>}, {pipeline_mode = #tpu.pipeline_mode<synchronous>, transform_indices = @transform_1, window_bounds = array<i64: 16, 72>}, {pipeline_mode = #tpu.pipeline_mode<synchronous>, transform_indices = @transform_2, window_bounds = array<i64: 8, 72>}, {pipeline_mode = #tpu.pipeline_mode<synchronous>, transform_indices = @transform_3, window_bounds = array<i64: 16, 1>}, {pipeline_mode = #tpu.pipeline_mode<synchronous>, transform_indices = @transform_4, window_bounds = array<i64: 8, 1>}, {pipeline_mode = #tpu.pipeline_mode<synchronous>, transform_indices = @transform_5, window_bounds = array<i64: 9, 8, 512>}, {transform_indices = @transform_6, window_bounds = array<i64: 8, 512>}]} {
    %c0 = arith.constant 0 : index
    %c0_0 = arith.constant 0 : index
    %0 = vector.load %arg1[%c0, %c0_0] : memref<8x512xf32, #tpu.memory_space<vmem>>, vector<8x512xf32>
    %c17_i32 = arith.constant 17 : i32
    %1 = tpu.dynamic_rotate %0 by %c17_i32 dim 1 : vector<8x512xf32>, i32 -> vector<8x512xf32>
    %c0_1 = arith.constant 0 : index
    %c0_2 = arith.constant 0 : index
    %c0_3 = arith.constant 0 : index
    %2 = vector.load %arg6[%c0_1, %c0_2, %c0_3] : memref<9x8x512xf32, #tpu.memory_space<vmem>>, vector<1x8x512xf32>
    %3 = vector.shape_cast %2 : vector<1x8x512xf32> to vector<8x512xf32>
    %4 = arith.mulf %1, %3 : vector<8x512xf32>
    %c0_4 = arith.constant 0 : index
    %c0_5 = arith.constant 0 : index
    %5 = vector.load %arg8[%c0_4, %c0_5] : memref<72x512xf32, #tpu.memory_space<vmem>>, vector<8x512xf32>
    tpu.vector_store %arg8[%c0_4, %c0_5], %4 {strides = array<i32>} : memref<72x512xf32, #tpu.memory_space<vmem>>, vector<8x512xf32>,
    %c16_i32 = arith.constant 16 : i32
    %6 = tpu.dynamic_rotate %0 by %c16_i32 dim 1 : vector<8x512xf32>, i32 -> vector<8x512xf32>
    %c1 = arith.constant 1 : index
    %c0_6 = arith.constant 0 : index
    %c0_7 = arith.constant 0 : index
    %7 = vector.load %arg6[%c1, %c0_6, %c0_7] : memref<9x8x512xf32, #tpu.memory_space<vmem>>, vector<1x8x512xf32>
    %8 = vector.shape_cast %7 : vector<1x8x512xf32> to vector<8x512xf32>
    %9 = arith.mulf %6, %8 : vector<8x512xf32>
    %c8 = arith.constant 8 : index
    %c0_8 = arith.constant 0 : index
    %10 = vector.load %arg8[%c8, %c0_8] : memref<72x512xf32, #tpu.memory_space<vmem>>, vector<8x512xf32>
    tpu.vector_store %arg8[%c8, %c0_8], %9 {strides = array<i32>} : memref<72x512xf32, #tpu.memory_space<vmem>>, vector<8x512xf32>,
    %c15_i32 = arith.constant 15 : i32
    %11 = tpu.dynamic_rotate %0 by %c15_i32 dim 1 : vector<8x512xf32>, i32 -> vector<8x512xf32>
    %c2 = arith.constant 2 : index
    %c0_9 = arith.constant 0 : index
    %c0_10 = arith.constant 0 : index
    %12 = vector.load %arg6[%c2, %c0_9, %c0_10] : memref<9x8x512xf32, #tpu.memory_space<vmem>>, vector<1x8x512xf32>
    %13 = vector.shape_cast %12 : vector<1x8x512xf32> to vector<8x512xf32>
    %14 = arith.mulf %11, %13 : vector<8x512xf32>
    %c16 = arith.constant 16 : index
    %c0_11 = arith.constant 0 : index
    %15 = vector.load %arg8[%c16, %c0_11] : memref<72x512xf32, #tpu.memory_space<vmem>>, vector<8x512xf32>
    tpu.vector_store %arg8[%c16, %c0_11], %14 {strides = array<i32>} : memref<72x512xf32, #tpu.memory_space<vmem>>, vector<8x512xf32>,
    %c1_i32 = arith.constant 1 : i32
    %16 = tpu.dynamic_rotate %0 by %c1_i32 dim 1 : vector<8x512xf32>, i32 -> vector<8x512xf32>
    %c3 = arith.constant 3 : index
    %c0_12 = arith.constant 0 : index
    %c0_13 = arith.constant 0 : index
    %17 = vector.load %arg6[%c3, %c0_12, %c0_13] : memref<9x8x512xf32, #tpu.memory_space<vmem>>, vector<1x8x512xf32>
    %18 = vector.shape_cast %17 : vector<1x8x512xf32> to vector<8x512xf32>
    %19 = arith.mulf %16, %18 : vector<8x512xf32>
    %c24 = arith.constant 24 : index
    %c0_14 = arith.constant 0 : index
    %20 = vector.load %arg8[%c24, %c0_14] : memref<72x512xf32, #tpu.memory_space<vmem>>, vector<8x512xf32>
    tpu.vector_store %arg8[%c24, %c0_14], %19 {strides = array<i32>} : memref<72x512xf32, #tpu.memory_space<vmem>>, vector<8x512xf32>,
    %c32 = arith.constant 32 : index
    %c0_15 = arith.constant 0 : index
    %21 = vector.load %arg8[%c32, %c0_15] : memref<72x512xf32, #tpu.memory_space<vmem>>, vector<8x512xf32>
    tpu.vector_store %arg8[%c32, %c0_15], %0 {strides = array<i32>} : memref<72x512xf32, #tpu.memory_space<vmem>>, vector<8x512xf32>,
    %c511_i32 = arith.constant 511 : i32
    %22 = tpu.dynamic_rotate %0 by %c511_i32 dim 1 : vector<8x512xf32>, i32 -> vector<8x512xf32>
    %c5 = arith.constant 5 : index
    %c0_16 = arith.constant 0 : index
    %c0_17 = arith.constant 0 : index
    %23 = vector.load %arg6[%c5, %c0_16, %c0_17] : memref<9x8x512xf32, #tpu.memory_space<vmem>>, vector<1x8x512xf32>
    %24 = vector.shape_cast %23 : vector<1x8x512xf32> to vector<8x512xf32>
    %25 = arith.mulf %22, %24 : vector<8x512xf32>
    %c40 = arith.constant 40 : index
    %c0_18 = arith.constant 0 : index
    %26 = vector.load %arg8[%c40, %c0_18] : memref<72x512xf32, #tpu.memory_space<vmem>>, vector<8x512xf32>
    tpu.vector_store %arg8[%c40, %c0_18], %25 {strides = array<i32>} : memref<72x512xf32, #tpu.memory_space<vmem>>, vector<8x512xf32>,
    %c497_i32 = arith.constant 497 : i32
    %27 = tpu.dynamic_rotate %0 by %c497_i32 dim 1 : vector<8x512xf32>, i32 -> vector<8x512xf32>
    %c6 = arith.constant 6 : index
    %c0_19 = arith.constant 0 : index
    %c0_20 = arith.constant 0 : index
    %28 = vector.load %arg6[%c6, %c0_19, %c0_20] : memref<9x8x512xf32, #tpu.memory_space<vmem>>, vector<1x8x512xf32>
    %29 = vector.shape_cast %28 : vector<1x8x512xf32> to vector<8x512xf32>
    %30 = arith.mulf %27, %29 : vector<8x512xf32>
    %c48 = arith.constant 48 : index
    %c0_21 = arith.constant 0 : index
    %31 = vector.load %arg8[%c48, %c0_21] : memref<72x512xf32, #tpu.memory_space<vmem>>, vector<8x512xf32>
    tpu.vector_store %arg8[%c48, %c0_21], %30 {strides = array<i32>} : memref<72x512xf32, #tpu.memory_space<vmem>>, vector<8x512xf32>,
    %c496_i32 = arith.constant 496 : i32
    %32 = tpu.dynamic_rotate %0 by %c496_i32 dim 1 : vector<8x512xf32>, i32 -> vector<8x512xf32>
    %c7 = arith.constant 7 : index
    %c0_22 = arith.constant 0 : index
    %c0_23 = arith.constant 0 : index
    %33 = vector.load %arg6[%c7, %c0_22, %c0_23] : memref<9x8x512xf32, #tpu.memory_space<vmem>>, vector<1x8x512xf32>
    %34 = vector.shape_cast %33 : vector<1x8x512xf32> to vector<8x512xf32>
    %35 = arith.mulf %32, %34 : vector<8x512xf32>
    %c56 = arith.constant 56 : index
    %c0_24 = arith.constant 0 : index
    %36 = vector.load %arg8[%c56, %c0_24] : memref<72x512xf32, #tpu.memory_space<vmem>>, vector<8x512xf32>
    tpu.vector_store %arg8[%c56, %c0_24], %35 {strides = array<i32>} : memref<72x512xf32, #tpu.memory_space<vmem>>, vector<8x512xf32>,
    %c495_i32 = arith.constant 495 : i32
    %37 = tpu.dynamic_rotate %0 by %c495_i32 dim 1 : vector<8x512xf32>, i32 -> vector<8x512xf32>
    %c8_25 = arith.constant 8 : index
    %c0_26 = arith.constant 0 : index
    %c0_27 = arith.constant 0 : index
    %38 = vector.load %arg6[%c8_25, %c0_26, %c0_27] : memref<9x8x512xf32, #tpu.memory_space<vmem>>, vector<1x8x512xf32>
    %39 = vector.shape_cast %38 : vector<1x8x512xf32> to vector<8x512xf32>
    %40 = arith.mulf %37, %39 : vector<8x512xf32>
    %c64 = arith.constant 64 : index
    %c0_28 = arith.constant 0 : index
    %41 = vector.load %arg8[%c64, %c0_28] : memref<72x512xf32, #tpu.memory_space<vmem>>, vector<8x512xf32>
    tpu.vector_store %arg8[%c64, %c0_28], %40 {strides = array<i32>} : memref<72x512xf32, #tpu.memory_space<vmem>>, vector<8x512xf32>,
    %c0_29 = arith.constant 0 : index
    %c0_30 = arith.constant 0 : index
    %42 = vector.load %arg2[%c0_29, %c0_30] : memref<16x72xf32, #tpu.memory_space<vmem>>, vector<16x72xf32>
    %c0_31 = arith.constant 0 : index
    %c0_32 = arith.constant 0 : index
    %43 = vector.load %arg8[%c0_31, %c0_32] : memref<72x512xf32, #tpu.memory_space<vmem>>, vector<72x512xf32>
    %cst = arith.constant dense<0.000000e+00> : vector<16x512xf32>
    %44 = tpu.matmul %42, %43, %cst {dimension_numbers = #tpu.dot_dimension_numbers<[1], [0], [0], [1], [0, 0, 1, 1], [], []>} : vector<16x72xf32>, vector<72x512xf32>, vector<16x512xf32> -> vector<16x512xf32>
    %c0_33 = arith.constant 0 : index
    %c0_34 = arith.constant 0 : index
    %45 = vector.load %arg4[%c0_33, %c0_34] : memref<16x1xf32, #tpu.memory_space<vmem>>, vector<16x1xf32>
    %46 = vector.broadcast %45 : vector<16x1xf32> to vector<16x512xf32>
    %47 = arith.addf %44, %46 : vector<16x512xf32>
    %48 = vector.extract_strided_slice %47 {offsets = [0, 0], sizes = [8, 512], strides = [1, 1]} : vector<16x512xf32> to vector<8x512xf32>
    %cst_35 = arith.constant 0.000000e+00 : f32
    %49 = vector.broadcast %cst_35 : f32 to vector<8x512xf32>
    %50 = arith.maximumf %48, %49 : vector<8x512xf32>
    %51 = vector.extract_strided_slice %47 {offsets = [8, 0], sizes = [8, 512], strides = [1, 1]} : vector<16x512xf32> to vector<8x512xf32>
    %c17_i32_36 = arith.constant 17 : i32
    %52 = tpu.dynamic_rotate %50 by %c17_i32_36 dim 1 : vector<8x512xf32>, i32 -> vector<8x512xf32>
    %c0_37 = arith.constant 0 : index
    %c0_38 = arith.constant 0 : index
    %c0_39 = arith.constant 0 : index
    %53 = vector.load %arg6[%c0_37, %c0_38, %c0_39] : memref<9x8x512xf32, #tpu.memory_space<vmem>>, vector<1x8x512xf32>
    %54 = vector.shape_cast %53 : vector<1x8x512xf32> to vector<8x512xf32>
    %55 = arith.mulf %52, %54 : vector<8x512xf32>
    %c0_40 = arith.constant 0 : index
    %c0_41 = arith.constant 0 : index
    %56 = vector.load %arg8[%c0_40, %c0_41] : memref<72x512xf32, #tpu.memory_space<vmem>>, vector<8x512xf32>
    tpu.vector_store %arg8[%c0_40, %c0_41], %55 {strides = array<i32>} : memref<72x512xf32, #tpu.memory_space<vmem>>, vector<8x512xf32>,
    %c16_i32_42 = arith.constant 16 : i32
    %57 = tpu.dynamic_rotate %50 by %c16_i32_42 dim 1 : vector<8x512xf32>, i32 -> vector<8x512xf32>
    %c1_43 = arith.constant 1 : index
    %c0_44 = arith.constant 0 : index
    %c0_45 = arith.constant 0 : index
    %58 = vector.load %arg6[%c1_43, %c0_44, %c0_45] : memref<9x8x512xf32, #tpu.memory_space<vmem>>, vector<1x8x512xf32>
    %59 = vector.shape_cast %58 : vector<1x8x512xf32> to vector<8x512xf32>
    %60 = arith.mulf %57, %59 : vector<8x512xf32>
    %c8_46 = arith.constant 8 : index
    %c0_47 = arith.constant 0 : index
    %61 = vector.load %arg8[%c8_46, %c0_47] : memref<72x512xf32, #tpu.memory_space<vmem>>, vector<8x512xf32>
    tpu.vector_store %arg8[%c8_46, %c0_47], %60 {strides = array<i32>} : memref<72x512xf32, #tpu.memory_space<vmem>>, vector<8x512xf32>,
    %c15_i32_48 = arith.constant 15 : i32
    %62 = tpu.dynamic_rotate %50 by %c15_i32_48 dim 1 : vector<8x512xf32>, i32 -> vector<8x512xf32>
    %c2_49 = arith.constant 2 : index
    %c0_50 = arith.constant 0 : index
    %c0_51 = arith.constant 0 : index
    %63 = vector.load %arg6[%c2_49, %c0_50, %c0_51] : memref<9x8x512xf32, #tpu.memory_space<vmem>>, vector<1x8x512xf32>
    %64 = vector.shape_cast %63 : vector<1x8x512xf32> to vector<8x512xf32>
    %65 = arith.mulf %62, %64 : vector<8x512xf32>
    %c16_52 = arith.constant 16 : index
    %c0_53 = arith.constant 0 : index
    %66 = vector.load %arg8[%c16_52, %c0_53] : memref<72x512xf32, #tpu.memory_space<vmem>>, vector<8x512xf32>
    tpu.vector_store %arg8[%c16_52, %c0_53], %65 {strides = array<i32>} : memref<72x512xf32, #tpu.memory_space<vmem>>, vector<8x512xf32>,
    %c1_i32_54 = arith.constant 1 : i32
    %67 = tpu.dynamic_rotate %50 by %c1_i32_54 dim 1 : vector<8x512xf32>, i32 -> vector<8x512xf32>
    %c3_55 = arith.constant 3 : index
    %c0_56 = arith.constant 0 : index
    %c0_57 = arith.constant 0 : index
    %68 = vector.load %arg6[%c3_55, %c0_56, %c0_57] : memref<9x8x512xf32, #tpu.memory_space<vmem>>, vector<1x8x512xf32>
    %69 = vector.shape_cast %68 : vector<1x8x512xf32> to vector<8x512xf32>
    %70 = arith.mulf %67, %69 : vector<8x512xf32>
    %c24_58 = arith.constant 24 : index
    %c0_59 = arith.constant 0 : index
    %71 = vector.load %arg8[%c24_58, %c0_59] : memref<72x512xf32, #tpu.memory_space<vmem>>, vector<8x512xf32>
    tpu.vector_store %arg8[%c24_58, %c0_59], %70 {strides = array<i32>} : memref<72x512xf32, #tpu.memory_space<vmem>>, vector<8x512xf32>,
    %c32_60 = arith.constant 32 : index
    %c0_61 = arith.constant 0 : index
    %72 = vector.load %arg8[%c32_60, %c0_61] : memref<72x512xf32, #tpu.memory_space<vmem>>, vector<8x512xf32>
    tpu.vector_store %arg8[%c32_60, %c0_61], %50 {strides = array<i32>} : memref<72x512xf32, #tpu.memory_space<vmem>>, vector<8x512xf32>,
    %c511_i32_62 = arith.constant 511 : i32
    %73 = tpu.dynamic_rotate %50 by %c511_i32_62 dim 1 : vector<8x512xf32>, i32 -> vector<8x512xf32>
    %c5_63 = arith.constant 5 : index
    %c0_64 = arith.constant 0 : index
    %c0_65 = arith.constant 0 : index
    %74 = vector.load %arg6[%c5_63, %c0_64, %c0_65] : memref<9x8x512xf32, #tpu.memory_space<vmem>>, vector<1x8x512xf32>
    %75 = vector.shape_cast %74 : vector<1x8x512xf32> to vector<8x512xf32>
    %76 = arith.mulf %73, %75 : vector<8x512xf32>
    %c40_66 = arith.constant 40 : index
    %c0_67 = arith.constant 0 : index
    %77 = vector.load %arg8[%c40_66, %c0_67] : memref<72x512xf32, #tpu.memory_space<vmem>>, vector<8x512xf32>
    tpu.vector_store %arg8[%c40_66, %c0_67], %76 {strides = array<i32>} : memref<72x512xf32, #tpu.memory_space<vmem>>, vector<8x512xf32>,
    %c497_i32_68 = arith.constant 497 : i32
    %78 = tpu.dynamic_rotate %50 by %c497_i32_68 dim 1 : vector<8x512xf32>, i32 -> vector<8x512xf32>
    %c6_69 = arith.constant 6 : index
    %c0_70 = arith.constant 0 : index
    %c0_71 = arith.constant 0 : index
    %79 = vector.load %arg6[%c6_69, %c0_70, %c0_71] : memref<9x8x512xf32, #tpu.memory_space<vmem>>, vector<1x8x512xf32>
    %80 = vector.shape_cast %79 : vector<1x8x512xf32> to vector<8x512xf32>
    %81 = arith.mulf %78, %80 : vector<8x512xf32>
    %c48_72 = arith.constant 48 : index
    %c0_73 = arith.constant 0 : index
    %82 = vector.load %arg8[%c48_72, %c0_73] : memref<72x512xf32, #tpu.memory_space<vmem>>, vector<8x512xf32>
    tpu.vector_store %arg8[%c48_72, %c0_73], %81 {strides = array<i32>} : memref<72x512xf32, #tpu.memory_space<vmem>>, vector<8x512xf32>,
    %c496_i32_74 = arith.constant 496 : i32
    %83 = tpu.dynamic_rotate %50 by %c496_i32_74 dim 1 : vector<8x512xf32>, i32 -> vector<8x512xf32>
    %c7_75 = arith.constant 7 : index
    %c0_76 = arith.constant 0 : index
    %c0_77 = arith.constant 0 : index
    %84 = vector.load %arg6[%c7_75, %c0_76, %c0_77] : memref<9x8x512xf32, #tpu.memory_space<vmem>>, vector<1x8x512xf32>
    %85 = vector.shape_cast %84 : vector<1x8x512xf32> to vector<8x512xf32>
    %86 = arith.mulf %83, %85 : vector<8x512xf32>
    %c56_78 = arith.constant 56 : index
    %c0_79 = arith.constant 0 : index
    %87 = vector.load %arg8[%c56_78, %c0_79] : memref<72x512xf32, #tpu.memory_space<vmem>>, vector<8x512xf32>
    tpu.vector_store %arg8[%c56_78, %c0_79], %86 {strides = array<i32>} : memref<72x512xf32, #tpu.memory_space<vmem>>, vector<8x512xf32>,
    %c495_i32_80 = arith.constant 495 : i32
    %88 = tpu.dynamic_rotate %50 by %c495_i32_80 dim 1 : vector<8x512xf32>, i32 -> vector<8x512xf32>
    %c8_81 = arith.constant 8 : index
    %c0_82 = arith.constant 0 : index
    %c0_83 = arith.constant 0 : index
    %89 = vector.load %arg6[%c8_81, %c0_82, %c0_83] : memref<9x8x512xf32, #tpu.memory_space<vmem>>, vector<1x8x512xf32>
    %90 = vector.shape_cast %89 : vector<1x8x512xf32> to vector<8x512xf32>
    %91 = arith.mulf %88, %90 : vector<8x512xf32>
    %c64_84 = arith.constant 64 : index
    %c0_85 = arith.constant 0 : index
    %92 = vector.load %arg8[%c64_84, %c0_85] : memref<72x512xf32, #tpu.memory_space<vmem>>, vector<8x512xf32>
    tpu.vector_store %arg8[%c64_84, %c0_85], %91 {strides = array<i32>} : memref<72x512xf32, #tpu.memory_space<vmem>>, vector<8x512xf32>,
    %c0_86 = arith.constant 0 : index
    %c0_87 = arith.constant 0 : index
    %93 = vector.load %arg3[%c0_86, %c0_87] : memref<8x72xf32, #tpu.memory_space<vmem>>, vector<8x72xf32>
    %c0_88 = arith.constant 0 : index
    %c0_89 = arith.constant 0 : index
    %94 = vector.load %arg8[%c0_88, %c0_89] : memref<72x512xf32, #tpu.memory_space<vmem>>, vector<72x512xf32>
    %cst_90 = arith.constant dense<0.000000e+00> : vector<8x512xf32>
    %95 = tpu.matmul %93, %94, %cst_90 {dimension_numbers = #tpu.dot_dimension_numbers<[1], [0], [0], [1], [0, 0, 1, 1], [], []>} : vector<8x72xf32>, vector<72x512xf32>, vector<8x512xf32> -> vector<8x512xf32>
    %c0_91 = arith.constant 0 : index
    %c0_92 = arith.constant 0 : index
    %96 = vector.load %arg5[%c0_91, %c0_92] : memref<8x1xf32, #tpu.memory_space<vmem>>, vector<8x1xf32>
    %97 = vector.broadcast %96 : vector<8x1xf32> to vector<8x512xf32>
    %98 = arith.addf %95, %97 : vector<8x512xf32>
    %99 = arith.addf %98, %51 : vector<8x512xf32>
    %cst_93 = arith.constant 0.000000e+00 : f32
    %100 = vector.broadcast %cst_93 : f32 to vector<8x512xf32>
    %101 = arith.maximumf %99, %100 : vector<8x512xf32>
    %c0_94 = arith.constant 0 : index
    %c0_95 = arith.constant 0 : index
    %102 = vector.load %arg7[%c0_94, %c0_95] : memref<8x512xf32, #tpu.memory_space<vmem>>, vector<8x512xf32>
    tpu.vector_store %arg7[%c0_94, %c0_95], %101 {strides = array<i32>} : memref<8x512xf32, #tpu.memory_space<vmem>>, vector<8x512xf32>,
    return
  }
  func.func @transform_0(%arg0: i32) -> (i32, i32) {
    %c0_i32 = arith.constant 0 : i32
    %c0_i32_0 = arith.constant 0 : i32
    return %c0_i32, %arg0 : i32, i32
  }
  func.func @transform_1(%arg0: i32) -> (i32, i32) {
    %c0_i32 = arith.constant 0 : i32
    %c0_i32_0 = arith.constant 0 : i32
    %c0_i32_1 = arith.constant 0 : i32
    return %c0_i32, %c0_i32_0 : i32, i32
  }
  func.func @transform_2(%arg0: i32) -> (i32, i32) {
    %c0_i32 = arith.constant 0 : i32
    %c0_i32_0 = arith.constant 0 : i32
    %c0_i32_1 = arith.constant 0 : i32
    return %c0_i32, %c0_i32_0 : i32, i32
  }
  func.func @transform_3(%arg0: i32) -> (i32, i32) {
    %c0_i32 = arith.constant 0 : i32
    %c0_i32_0 = arith.constant 0 : i32
    %c0_i32_1 = arith.constant 0 : i32
    return %c0_i32, %c0_i32_0 : i32, i32
  }
  func.func @transform_4(%arg0: i32) -> (i32, i32) {
    %c0_i32 = arith.constant 0 : i32
    %c0_i32_0 = arith.constant 0 : i32
    %c0_i32_1 = arith.constant 0 : i32
    return %c0_i32, %c0_i32_0 : i32, i32
  }
  func.func @transform_5(%arg0: i32) -> (i32, i32, i32) {
    %c0_i32 = arith.constant 0 : i32
    %c0_i32_0 = arith.constant 0 : i32
    %c0_i32_1 = arith.constant 0 : i32
    %c0_i32_2 = arith.constant 0 : i32
    return %c0_i32, %c0_i32_0, %c0_i32_1 : i32, i32, i32
  }
  func.func @transform_6(%arg0: i32) -> (i32, i32) {
    %c0_i32 = arith.constant 0 : i32
    %c0_i32_0 = arith.constant 0 : i32
    return %c0_i32, %arg0 : i32, i32
  }
}

</mosaic_0001>

<llo_original>
// kernel: forward.1
$region0: #{forward.1}
  #allocation0 [shape = 'u32[]', space=smem, size = 0x4, offset = 0x4, fixed_abs, tag = 'smem constant byte address 0x4 - core index']
  #allocation1 [shape = 'u32[72,128]{1,0:T(1,128)}', space=vmem, size = 0x9000, scoped, tag = 'internal scratch']
  #allocation2 [shape = 'f32[72,512]{1,0:T(8,128)}', space=vmem, size = 0x24000, scoped, tag = 'scratch operand']
  %s0 = inlined_call_operand.vmem [shape: f32[8,512], index: 0, kind: input, shape index: {}]
  %s1 = inlined_call_operand.vmem [shape: f32[16,72], index: 1, kind: input, shape index: {}]
  %s2 = inlined_call_operand.vmem [shape: f32[8,72], index: 2, kind: input, shape index: {}]
  %s3 = inlined_call_operand.vmem [shape: f32[16,1], index: 3, kind: input, shape index: {}]
  %s4 = inlined_call_operand.vmem [shape: f32[8,1], index: 4, kind: input, shape index: {}]
  %s5 = inlined_call_operand.hbm [shape: f32[9,8,512], index: 5, kind: input, shape index: {}]
  %s6 = inlined_call_operand.vmem [shape: f32[8,512], index: 6, kind: output, shape index: {}]
  %s7 = sld [smem:[#allocation0]]
  $region38: #{forward.1} parent=0
    _
  %s9 = ssub.s32 1, %s7
  %s10 = scalar_select 0, %s9, %s7
  $region1: #{forward.1} parent=0
    #allocation3 [shape = 'u8[147456]{0}', space=vmem, size = 0x24000, scoped, tag = 'input window, operand 5, single buffered']
    #allocation4 [shape = 's32[1]{0}', space=sflag, size = 0x4, scoped, tag = 'scoped memory for forward.1']
    %11 = vsyncpa [#allocation4], 0
    // Predicated region
    $region2: #{forward.1} parent=1 // pred_check
      _
    $region3: #{forward.1} parent=1 // pred_check_branch
      %13 = sbr.rel (0) target = $region5
    $region4: #{forward.1} parent=1 // pred_region
      _
    $region5: #{forward.1} parent=1 // pred_fallthru
      _
    // Predicated region
    $region6: #{forward.1} parent=1 // pred_check
      _
    $region7: #{forward.1} parent=1 // pred_check_branch
      %15 = sbr.rel (0) target = $region9
    $region8: #{forward.1} parent=1 // pred_region
      _
    $region9: #{forward.1} parent=1 // pred_fallthru
      _
    // Predicated region
    $region10: #{forward.1} parent=1 // pred_check
      _
    $region11: #{forward.1} parent=1 // pred_check_branch
      %17 = sbr.rel (0) target = $region13
    $region12: #{forward.1} parent=1 // pred_region
      _
    $region13: #{forward.1} parent=1 // pred_fallthru
      _
    // Predicated region
    $region14: #{forward.1} parent=1 // pred_check
      _
    $region15: #{forward.1} parent=1 // pred_check_branch
      %19 = sbr.rel (0) target = $region17
    $region16: #{forward.1} parent=1 // pred_region
      _
    $region17: #{forward.1} parent=1 // pred_fallthru
      _
    // Predicated region
    $region18: #{forward.1} parent=1 // pred_check
      _
    $region19: #{forward.1} parent=1 // pred_check_branch
      %21 = sbr.rel (0) target = $region21
    $region20: #{forward.1} parent=1 // pred_region
      _
    $region21: #{forward.1} parent=1 // pred_fallthru
      _
    // Predicated region
    $region22: #{forward.1} parent=1 // pred_check
      _
    $region23: #{forward.1} parent=1 // pred_check_branch
      %23 = sbr.rel (0) target = $region25
    $region24: #{forward.1} parent=1 // pred_region
      %25 = vsyncadd [#allocation4], 0
      %s26 = sshll.u32 %s5, 4
      %s27 = int_to_ptr.hbm [resolvable:$true] %s26
      %s28 = sshll.u32 [#allocation3], 4
      %s29 = int_to_ptr.vmem [resolvable:$true] %s28
      %34 = dma.hbm_to_vmem [thread:$0]  %s27, 4608, %s29, [#allocation4], 512, 512, 32
    $region25: #{forward.1} parent=1 // pred_fallthru
      _
    // Predicated region
    $region26: #{forward.1} parent=1 // pred_check
      _
    $region27: #{forward.1} parent=1 // pred_check_branch
      %36 = sbr.rel (0) target = $region29
    $region28: #{forward.1} parent=1 // pred_region
      %38 = dma.done [#allocation4], 4608
    $region29: #{forward.1} parent=1 // pred_fallthru
      _
    %v39 = vld [vmem:[%s0] sm:$0xff]
    %v40 = vld [vmem:[%s0 + $0x8] sm:$0xff]
    %v41 = vld [vmem:[%s0 + $0x10] sm:$0xff]
    %v42 = vld [vmem:[%s0 + $0x18] sm:$0xff]
    %43 = vrot.lane.b32.xlu0 %v39, 17
    %v44 = vpop.permute.xlu0 %43
    %45 = vrot.lane.b32.xlu0 %v40, 17
    %v46 = vpop.permute.xlu0 %45
    %47 = vrot.lane.b32.xlu0 %v41, 17
    %v48 = vpop.permute.xlu0 %47
    %49 = vrot.lane.b32.xlu0 %v42, 17
    %v50 = vpop.permute.xlu0 %49
    %v51 = vlaneseq
    %v52 = vand.u32 %v51, 127
    %vm53 = vcmp.lt.s32.totalorder %v52, 17
    %v54 = vsel %vm53, %v48, %v50
    %v55 = vsel %vm53, %v46, %v48
    %v56 = vsel %vm53, %v44, %v46
    %v57 = vsel %vm53, %v50, %v44
    %v58 = vld [vmem:[#allocation3] sm:$0xff]
    %v59 = vld [vmem:[#allocation3 + $0x8] sm:$0xff]
    %v60 = vld [vmem:[#allocation3 + $0x10] sm:$0xff]
    %v61 = vld [vmem:[#allocation3 + $0x18] sm:$0xff]
    %v62 = vmul.f32 %v57, %v58
    %v63 = vmul.f32 %v56, %v59
    %v64 = vmul.f32 %v55, %v60
    %v65 = vmul.f32 %v54, %v61
    %66 = vst [vmem:[#allocation2] sm:$0xff] %v62
    %67 = vst [vmem:[#allocation2 + $0x8] sm:$0xff] %v63
    %68 = vst [vmem:[#allocation2 + $0x10] sm:$0xff] %v64
    %69 = vst [vmem:[#allocation2 + $0x18] sm:$0xff] %v65
    %70 = vrot.lane.b32.xlu0 %v39, 16
    %v71 = vpop.permute.xlu0 %70
    %72 = vrot.lane.b32.xlu0 %v40, 16
    %v73 = vpop.permute.xlu0 %72
    %74 = vrot.lane.b32.xlu0 %v41, 16
    %v75 = vpop.permute.xlu0 %74
    %76 = vrot.lane.b32.xlu0 %v42, 16
    %v77 = vpop.permute.xlu0 %76
    %vm78 = vcmp.lt.s32.totalorder %v52, 16
    %v79 = vsel %vm78, %v75, %v77
    %v80 = vsel %vm78, %v73, %v75
    %v81 = vsel %vm78, %v71, %v73
    %v82 = vsel %vm78, %v77, %v71
    %s83 = scalar_lea.vmem [#allocation3], 32
    %v84 = vld [vmem:[%s83] sm:$0xff]
    %v85 = vld [vmem:[%s83 + $0x8] sm:$0xff]
    %v86 = vld [vmem:[%s83 + $0x10] sm:$0xff]
    %v87 = vld [vmem:[%s83 + $0x18] sm:$0xff]
    %v88 = vmul.f32 %v82, %v84
    %v89 = vmul.f32 %v81, %v85
    %v90 = vmul.f32 %v80, %v86
    %v91 = vmul.f32 %v79, %v87
    %92 = vst [vmem:[#allocation2 + $0x20] sm:$0xff] %v88
    %93 = vst [vmem:[#allocation2 + $0x28] sm:$0xff] %v89
    %94 = vst [vmem:[#allocation2 + $0x30] sm:$0xff] %v90
    %95 = vst [vmem:[#allocation2 + $0x38] sm:$0xff] %v91
    %96 = vrot.lane.b32.xlu0 %v39, 15
    %v97 = vpop.permute.xlu0 %96
    %98 = vrot.lane.b32.xlu0 %v40, 15
    %v99 = vpop.permute.xlu0 %98
    %100 = vrot.lane.b32.xlu0 %v41, 15
    %v101 = vpop.permute.xlu0 %100
    %102 = vrot.lane.b32.xlu0 %v42, 15
    %v103 = vpop.permute.xlu0 %102
    %vm104 = vcmp.lt.s32.totalorder %v52, 15
    %v105 = vsel %vm104, %v101, %v103
    %v106 = vsel %vm104, %v99, %v101
    %v107 = vsel %vm104, %v97, %v99
    %v108 = vsel %vm104, %v103, %v97
    %s109 = scalar_lea.vmem [#allocation3], 64
    %v110 = vld [vmem:[%s109] sm:$0xff]
    %v111 = vld [vmem:[%s109 + $0x8] sm:$0xff]
    %v112 = vld [vmem:[%s109 + $0x10] sm:$0xff]
    %v113 = vld [vmem:[%s109 + $0x18] sm:$0xff]
    %v114 = vmul.f32 %v108, %v110
    %v115 = vmul.f32 %v107, %v111
    %v116 = vmul.f32 %v106, %v112
    %v117 = vmul.f32 %v105, %v113
    %118 = vst [vmem:[#allocation2 + $0x40] sm:$0xff] %v114
    %119 = vst [vmem:[#allocation2 + $0x48] sm:$0xff] %v115
    %120 = vst [vmem:[#allocation2 + $0x50] sm:$0xff] %v116
    %121 = vst [vmem:[#allocation2 + $0x58] sm:$0xff] %v117
    %122 = vrot.lane.b32.xlu0 %v39, 1
    %v123 = vpop.permute.xlu0 %122
    %124 = vrot.lane.b32.xlu0 %v40, 1
    %v125 = vpop.permute.xlu0 %124
    %126 = vrot.lane.b32.xlu0 %v41, 1
    %v127 = vpop.permute.xlu0 %126
    %128 = vrot.lane.b32.xlu0 %v42, 1
    %v129 = vpop.permute.xlu0 %128
    %vm130 = vcmp.lt.s32.totalorder %v52, 1
    %v131 = vsel %vm130, %v127, %v129
    %v132 = vsel %vm130, %v125, %v127
    %v133 = vsel %vm130, %v123, %v125
    %v134 = vsel %vm130, %v129, %v123
    %s135 = scalar_lea.vmem [#allocation3], 96
    %v136 = vld [vmem:[%s135] sm:$0xff]
    %v137 = vld [vmem:[%s135 + $0x8] sm:$0xff]
    %v138 = vld [vmem:[%s135 + $0x10] sm:$0xff]
    %v139 = vld [vmem:[%s135 + $0x18] sm:$0xff]
    %v140 = vmul.f32 %v134, %v136
    %v141 = vmul.f32 %v133, %v137
    %v142 = vmul.f32 %v132, %v138
    %v143 = vmul.f32 %v131, %v139
    %144 = vst [vmem:[#allocation2 + $0x60] sm:$0xff] %v140
    %145 = vst [vmem:[#allocation2 + $0x68] sm:$0xff] %v141
    %146 = vst [vmem:[#allocation2 + $0x70] sm:$0xff] %v142
    %147 = vst [vmem:[#allocation2 + $0x78] sm:$0xff] %v143
    %148 = vst [vmem:[#allocation2 + $0x80] sm:$0xff] %v39
    %149 = vst [vmem:[#allocation2 + $0x88] sm:$0xff] %v40
    %150 = vst [vmem:[#allocation2 + $0x90] sm:$0xff] %v41
    %151 = vst [vmem:[#allocation2 + $0x98] sm:$0xff] %v42
    %152 = vrot.lane.b32.xlu0 %v39, 127
    %v153 = vpop.permute.xlu0 %152
    %154 = vrot.lane.b32.xlu0 %v40, 127
    %v155 = vpop.permute.xlu0 %154
    %156 = vrot.lane.b32.xlu0 %v41, 127
    %v157 = vpop.permute.xlu0 %156
    %158 = vrot.lane.b32.xlu0 %v42, 127
    %v159 = vpop.permute.xlu0 %158
    %vm160 = vcmp.lt.s32.totalorder %v52, 127
    %v161 = vsel %vm160, %v157, %v159
    %v162 = vsel %vm160, %v155, %v157
    %v163 = vsel %vm160, %v153, %v155
    %v164 = vsel %vm160, %v159, %v153
    %s165 = scalar_lea.vmem [#allocation3], 160
    %v166 = vld [vmem:[%s165] sm:$0xff]
    %v167 = vld [vmem:[%s165 + $0x8] sm:$0xff]
    %v168 = vld [vmem:[%s165 + $0x10] sm:$0xff]
    %v169 = vld [vmem:[%s165 + $0x18] sm:$0xff]
    %v170 = vmul.f32 %v163, %v166
    %v171 = vmul.f32 %v162, %v167
    %v172 = vmul.f32 %v161, %v168
    %v173 = vmul.f32 %v164, %v169
    %174 = vst [vmem:[#allocation2 + $0xa0] sm:$0xff] %v170
    %175 = vst [vmem:[#allocation2 + $0xa8] sm:$0xff] %v171
    %176 = vst [vmem:[#allocation2 + $0xb0] sm:$0xff] %v172
    %177 = vst [vmem:[#allocation2 + $0xb8] sm:$0xff] %v173
    %178 = vrot.lane.b32.xlu0 %v39, 113
    %v179 = vpop.permute.xlu0 %178
    %180 = vrot.lane.b32.xlu0 %v40, 113
    %v181 = vpop.permute.xlu0 %180
    %182 = vrot.lane.b32.xlu0 %v41, 113
    %v183 = vpop.permute.xlu0 %182
    %184 = vrot.lane.b32.xlu0 %v42, 113
    %v185 = vpop.permute.xlu0 %184
    %vm186 = vcmp.lt.s32.totalorder %v52, 113
    %v187 = vsel %vm186, %v183, %v185
    %v188 = vsel %vm186, %v181, %v183
    %v189 = vsel %vm186, %v179, %v181
    %v190 = vsel %vm186, %v185, %v179
    %s191 = scalar_lea.vmem [#allocation3], 192
    %v192 = vld [vmem:[%s191] sm:$0xff]
    %v193 = vld [vmem:[%s191 + $0x8] sm:$0xff]
    %v194 = vld [vmem:[%s191 + $0x10] sm:$0xff]
    %v195 = vld [vmem:[%s191 + $0x18] sm:$0xff]
    %v196 = vmul.f32 %v189, %v192
    %v197 = vmul.f32 %v188, %v193
    %v198 = vmul.f32 %v187, %v194
    %v199 = vmul.f32 %v190, %v195
    %200 = vst [vmem:[#allocation2 + $0xc0] sm:$0xff] %v196
    %201 = vst [vmem:[#allocation2 + $0xc8] sm:$0xff] %v197
    %202 = vst [vmem:[#allocation2 + $0xd0] sm:$0xff] %v198
    %203 = vst [vmem:[#allocation2 + $0xd8] sm:$0xff] %v199
    %204 = vrot.lane.b32.xlu0 %v39, 112
    %v205 = vpop.permute.xlu0 %204
    %206 = vrot.lane.b32.xlu0 %v40, 112
    %v207 = vpop.permute.xlu0 %206
    %208 = vrot.lane.b32.xlu0 %v41, 112
    %v209 = vpop.permute.xlu0 %208
    %210 = vrot.lane.b32.xlu0 %v42, 112
    %v211 = vpop.permute.xlu0 %210
    %vm212 = vcmp.lt.s32.totalorder %v52, 112
    %v213 = vsel %vm212, %v209, %v211
    %v214 = vsel %vm212, %v207, %v209
    %v215 = vsel %vm212, %v205, %v207
    %v216 = vsel %vm212, %v211, %v205
    %s217 = scalar_lea.vmem [#allocation3], 224
    %v218 = vld [vmem:[%s217] sm:$0xff]
    %v219 = vld [vmem:[%s217 + $0x8] sm:$0xff]
    %v220 = vld [vmem:[%s217 + $0x10] sm:$0xff]
    %v221 = vld [vmem:[%s217 + $0x18] sm:$0xff]
    %v222 = vmul.f32 %v215, %v218
    %v223 = vmul.f32 %v214, %v219
    %v224 = vmul.f32 %v213, %v220
    %v225 = vmul.f32 %v216, %v221
    %226 = vst [vmem:[#allocation2 + $0xe0] sm:$0xff] %v222
    %227 = vst [vmem:[#allocation2 + $0xe8] sm:$0xff] %v223
    %228 = vst [vmem:[#allocation2 + $0xf0] sm:$0xff] %v224
    %229 = vst [vmem:[#allocation2 + $0xf8] sm:$0xff] %v225
    %230 = vrot.lane.b32.xlu0 %v39, 111
    %v231 = vpop.permute.xlu0 %230
    %232 = vrot.lane.b32.xlu0 %v40, 111
    %v233 = vpop.permute.xlu0 %232
    %234 = vrot.lane.b32.xlu0 %v41, 111
    %v235 = vpop.permute.xlu0 %234
    %236 = vrot.lane.b32.xlu0 %v42, 111
    %v237 = vpop.permute.xlu0 %236
    %vm238 = vcmp.lt.s32.totalorder %v52, 111
    %v239 = vsel %vm238, %v235, %v237
    %v240 = vsel %vm238, %v233, %v235
    %v241 = vsel %vm238, %v231, %v233
    %v242 = vsel %vm238, %v237, %v231
    %s243 = scalar_lea.vmem [#allocation3], 256
    %v244 = vld [vmem:[%s243] sm:$0xff]
    %v245 = vld [vmem:[%s243 + $0x8] sm:$0xff]
    %v246 = vld [vmem:[%s243 + $0x10] sm:$0xff]
    %v247 = vld [vmem:[%s243 + $0x18] sm:$0xff]
    %v248 = vmul.f32 %v241, %v244
    %v249 = vmul.f32 %v240, %v245
    %v250 = vmul.f32 %v239, %v246
    %v251 = vmul.f32 %v242, %v247
    %252 = vst [vmem:[#allocation2 + $0x100] sm:$0xff] %v248
    %253 = vst [vmem:[#allocation2 + $0x108] sm:$0xff] %v249
    %254 = vst [vmem:[#allocation2 + $0x110] sm:$0xff] %v250
    %255 = vst [vmem:[#allocation2 + $0x118] sm:$0xff] %v251
    %v256 = vld [vmem:[%s1] sm:$0xff]
    %v257 = vld [vmem:[%s1 + $0x8] sm:$0xff]
    %v258 = vld [vmem:[#allocation2] sm:$0xff]
    %v259 = vld [vmem:[#allocation2 + $0x8] sm:$0xff]
    %v260 = vld [vmem:[#allocation2 + $0x10] sm:$0xff]
    %v261 = vld [vmem:[#allocation2 + $0x18] sm:$0xff]
    %v262 = vld [vmem:[#allocation2 + $0x20] sm:$0xff]
    %v263 = vld [vmem:[#allocation2 + $0x28] sm:$0xff]
    %v264 = vld [vmem:[#allocation2 + $0x30] sm:$0xff]
    %v265 = vld [vmem:[#allocation2 + $0x38] sm:$0xff]
    %v266 = vld [vmem:[#allocation2 + $0x40] sm:$0xff]
    %v267 = vld [vmem:[#allocation2 + $0x48] sm:$0xff]
    %v268 = vld [vmem:[#allocation2 + $0x50] sm:$0xff]
    %v269 = vld [vmem:[#allocation2 + $0x58] sm:$0xff]
    %v270 = vld [vmem:[#allocation2 + $0x60] sm:$0xff]
    %v271 = vld [vmem:[#allocation2 + $0x68] sm:$0xff]
    %v272 = vld [vmem:[#allocation2 + $0x70] sm:$0xff]
    %v273 = vld [vmem:[#allocation2 + $0x78] sm:$0xff]
    %v274 = vld [vmem:[#allocation2 + $0x80] sm:$0xff]
    %v275 = vld [vmem:[#allocation2 + $0x88] sm:$0xff]
    %v276 = vld [vmem:[#allocation2 + $0x90] sm:$0xff]
    %v277 = vld [vmem:[#allocation2 + $0x98] sm:$0xff]
    %v278 = vld [vmem:[#allocation2 + $0xa0] sm:$0xff]
    %v279 = vld [vmem:[#allocation2 + $0xa8] sm:$0xff]
    %v280 = vld [vmem:[#allocation2 + $0xb0] sm:$0xff]
    %v281 = vld [vmem:[#allocation2 + $0xb8] sm:$0xff]
    %v282 = vld [vmem:[#allocation2 + $0xc0] sm:$0xff]
    %v283 = vld [vmem:[#allocation2 + $0xc8] sm:$0xff]
    %v284 = vld [vmem:[#allocation2 + $0xd0] sm:$0xff]
    %v285 = vld [vmem:[#allocation2 + $0xd8] sm:$0xff]
    %v286 = vld [vmem:[#allocation2 + $0xe0] sm:$0xff]
    %v287 = vld [vmem:[#allocation2 + $0xe8] sm:$0xff]
    %v288 = vld [vmem:[#allocation2 + $0xf0] sm:$0xff]
    %v289 = vld [vmem:[#allocation2 + $0xf8] sm:$0xff]
    %v290 = vld [vmem:[#allocation2 + $0x100] sm:$0xff]
    %v291 = vld [vmem:[#allocation2 + $0x108] sm:$0xff]
    %v292 = vld [vmem:[#allocation2 + $0x110] sm:$0xff]
    %v293 = vld [vmem:[#allocation2 + $0x118] sm:$0xff]
    %v294 = vld [vmem:[%s3] sm:$0xff]
    %v295 = vld [vmem:[%s3 + $0x8] sm:$0xff]
    %297 = vset.pattern.permute.xlu0 0
    %298 = vperm.xlu0 %297, %v294
    %v299 = vpop.permute.xlu0 %298
    %302 = vset.pattern.permute.xlu0 0
    %303 = vperm.xlu0 %302, %v295
    %v304 = vpop.permute.xlu0 %303
    %vm306 = vcmask 588800
    %v308 = vsel %vm306, %v256, 0
    %v311 = vsel %vm306, %v257, 0
    %313 = vmatpush.msra.mxu0 0.0
    %314 = vmatpush.msra.mxu0 0.0
    %315 = vmatpush.msra.mxu0 0.0
    %316 = vmatpush.msra.mxu0 0.0
    %317 = vmatpush.msra.mxu0 0.0
    %318 = vmatpush.msra.mxu0 0.0
    %319 = vmatpush.msra.mxu0 0.0
    %320 = vmatpush.msra.mxu0 %v290
    %321 = vmatpush.msra.mxu0 %v286
    %322 = vmatpush.msra.mxu0 %v282
    %323 = vmatpush.msra.mxu0 %v278
    %324 = vmatpush.msra.mxu0 %v274
    %325 = vmatpush.msra.mxu0 %v270
    %326 = vmatpush.msra.mxu0 %v266
    %327 = vmatpush.msra.mxu0 %v262
    %328 = vmatpush.msra.mxu0 %v258
    %329 = vmatmul.f32.gmra.mxu0 %v308
    %v330 = vpop.f32.mrf.mxu0
    %v331 = vadd.f32 %v299, %v330
    %332 = vmatmul.f32.gmra.mxu0 %v311
    %v333 = vpop.f32.mrf.mxu0
    %v334 = vadd.f32 %v304, %v333
    %335 = vdwg.mxu0
    %336 = vmatpush.msra.mxu0 0.0
    %337 = vmatpush.msra.mxu0 0.0
    %338 = vmatpush.msra.mxu0 0.0
    %339 = vmatpush.msra.mxu0 0.0
    %340 = vmatpush.msra.mxu0 0.0
    %341 = vmatpush.msra.mxu0 0.0
    %342 = vmatpush.msra.mxu0 0.0
    %343 = vmatpush.msra.mxu0 %v291
    %344 = vmatpush.msra.mxu0 %v287
    %345 = vmatpush.msra.mxu0 %v283
    %346 = vmatpush.msra.mxu0 %v279
    %347 = vmatpush.msra.mxu0 %v275
    %348 = vmatpush.msra.mxu0 %v271
    %349 = vmatpush.msra.mxu0 %v267
    %350 = vmatpush.msra.mxu0 %v263
    %351 = vmatpush.msra.mxu0 %v259
    %352 = vmatmul.f32.gmra.mxu0 %v308
    %v353 = vpop.f32.mrf.mxu0
    %v354 = vadd.f32 %v299, %v353
    %355 = vmatmul.f32.gmra.mxu0 %v311
    %v356 = vpop.f32.mrf.mxu0
    %v357 = vadd.f32 %v304, %v356
    %358 = vdwg.mxu0
    %359 = vmatpush.msra.mxu0 0.0
    %360 = vmatpush.msra.mxu0 0.0
    %361 = vmatpush.msra.mxu0 0.0
    %362 = vmatpush.msra.mxu0 0.0
    %363 = vmatpush.msra.mxu0 0.0
    %364 = vmatpush.msra.mxu0 0.0
    %365 = vmatpush.msra.mxu0 0.0
    %366 = vmatpush.msra.mxu0 %v292
    %367 = vmatpush.msra.mxu0 %v288
    %368 = vmatpush.msra.mxu0 %v284
    %369 = vmatpush.msra.mxu0 %v280
    %370 = vmatpush.msra.mxu0 %v276
    %371 = vmatpush.msra.mxu0 %v272
    %372 = vmatpush.msra.mxu0 %v268
    %373 = vmatpush.msra.mxu0 %v264
    %374 = vmatpush.msra.mxu0 %v260
    %375 = vmatmul.f32.gmra.mxu0 %v308
    %v376 = vpop.f32.mrf.mxu0
    %v377 = vadd.f32 %v299, %v376
    %378 = vmatmul.f32.gmra.mxu0 %v311
    %v379 = vpop.f32.mrf.mxu0
    %v380 = vadd.f32 %v304, %v379
    %381 = vdwg.mxu0
    %382 = vmatpush.msra.mxu0 0.0
    %383 = vmatpush.msra.mxu0 0.0
    %384 = vmatpush.msra.mxu0 0.0
    %385 = vmatpush.msra.mxu0 0.0
    %386 = vmatpush.msra.mxu0 0.0
    %387 = vmatpush.msra.mxu0 0.0
    %388 = vmatpush.msra.mxu0 0.0
    %389 = vmatpush.msra.mxu0 %v293
    %390 = vmatpush.msra.mxu0 %v289
    %391 = vmatpush.msra.mxu0 %v285
    %392 = vmatpush.msra.mxu0 %v281
    %393 = vmatpush.msra.mxu0 %v277
    %394 = vmatpush.msra.mxu0 %v273
    %395 = vmatpush.msra.mxu0 %v269
    %396 = vmatpush.msra.mxu0 %v265
    %397 = vmatpush.msra.mxu0 %v261
    %398 = vmatmul.f32.gmra.mxu0 %v308
    %v399 = vpop.f32.mrf.mxu0
    %v400 = vadd.f32 %v299, %v399
    %401 = vmatmul.f32.gmra.mxu0 %v311
    %v402 = vpop.f32.mrf.mxu0
    %v403 = vadd.f32 %v304, %v402
    %404 = vdwg.mxu0
    %v405 = vmax.f32 %v331, 0.0
    %v406 = vmax.f32 %v354, 0.0
    %v407 = vmax.f32 %v377, 0.0
    %v408 = vmax.f32 %v400, 0.0
    %409 = vrot.lane.b32.xlu0 %v405, 17
    %v410 = vpop.permute.xlu0 %409
    %411 = vrot.lane.b32.xlu0 %v406, 17
    %v412 = vpop.permute.xlu0 %411
    %413 = vrot.lane.b32.xlu0 %v407, 17
    %v414 = vpop.permute.xlu0 %413
    %415 = vrot.lane.b32.xlu0 %v408, 17
    %v416 = vpop.permute.xlu0 %415
    %v417 = vsel %vm53, %v414, %v416
    %v418 = vsel %vm53, %v412, %v414
    %v419 = vsel %vm53, %v410, %v412
    %v420 = vsel %vm53, %v416, %v410
    %v421 = vld [vmem:[#allocation3] sm:$0xff]
    %v422 = vld [vmem:[#allocation3 + $0x8] sm:$0xff]
    %v423 = vld [vmem:[#allocation3 + $0x10] sm:$0xff]
    %v424 = vld [vmem:[#allocation3 + $0x18] sm:$0xff]
    %v425 = vmul.f32 %v420, %v421
    %v426 = vmul.f32 %v419, %v422
    %v427 = vmul.f32 %v418, %v423
    %v428 = vmul.f32 %v417, %v424
    %429 = vst [vmem:[#allocation2] sm:$0xff] %v425
    %430 = vst [vmem:[#allocation2 + $0x8] sm:$0xff] %v426
    %431 = vst [vmem:[#allocation2 + $0x10] sm:$0xff] %v427
    %432 = vst [vmem:[#allocation2 + $0x18] sm:$0xff] %v428
    %433 = vrot.lane.b32.xlu0 %v405, 16
    %v434 = vpop.permute.xlu0 %433
    %435 = vrot.lane.b32.xlu0 %v406, 16
    %v436 = vpop.permute.xlu0 %435
    %437 = vrot.lane.b32.xlu0 %v407, 16
    %v438 = vpop.permute.xlu0 %437
    %439 = vrot.lane.b32.xlu0 %v408, 16
    %v440 = vpop.permute.xlu0 %439
    %v441 = vsel %vm78, %v438, %v440
    %v442 = vsel %vm78, %v436, %v438
    %v443 = vsel %vm78, %v434, %v436
    %v444 = vsel %vm78, %v440, %v434
    %v445 = vld [vmem:[%s83] sm:$0xff]
    %v446 = vld [vmem:[%s83 + $0x8] sm:$0xff]
    %v447 = vld [vmem:[%s83 + $0x10] sm:$0xff]
    %v448 = vld [vmem:[%s83 + $0x18] sm:$0xff]
    %v449 = vmul.f32 %v444, %v445
    %v450 = vmul.f32 %v443, %v446
    %v451 = vmul.f32 %v442, %v447
    %v452 = vmul.f32 %v441, %v448
    %453 = vst [vmem:[#allocation2 + $0x20] sm:$0xff] %v449
    %454 = vst [vmem:[#allocation2 + $0x28] sm:$0xff] %v450
    %455 = vst [vmem:[#allocation2 + $0x30] sm:$0xff] %v451
    %456 = vst [vmem:[#allocation2 + $0x38] sm:$0xff] %v452
    %457 = vrot.lane.b32.xlu0 %v405, 15
    %v458 = vpop.permute.xlu0 %457
    %459 = vrot.lane.b32.xlu0 %v406, 15
    %v460 = vpop.permute.xlu0 %459
    %461 = vrot.lane.b32.xlu0 %v407, 15
    %v462 = vpop.permute.xlu0 %461
    %463 = vrot.lane.b32.xlu0 %v408, 15
    %v464 = vpop.permute.xlu0 %463
    %v465 = vsel %vm104, %v462, %v464
    %v466 = vsel %vm104, %v460, %v462
    %v467 = vsel %vm104, %v458, %v460
    %v468 = vsel %vm104, %v464, %v458
    %v469 = vld [vmem:[%s109] sm:$0xff]
    %v470 = vld [vmem:[%s109 + $0x8] sm:$0xff]
    %v471 = vld [vmem:[%s109 + $0x10] sm:$0xff]
    %v472 = vld [vmem:[%s109 + $0x18] sm:$0xff]
    %v473 = vmul.f32 %v468, %v469
    %v474 = vmul.f32 %v467, %v470
    %v475 = vmul.f32 %v466, %v471
    %v476 = vmul.f32 %v465, %v472
    %477 = vst [vmem:[#allocation2 + $0x40] sm:$0xff] %v473
    %478 = vst [vmem:[#allocation2 + $0x48] sm:$0xff] %v474
    %479 = vst [vmem:[#allocation2 + $0x50] sm:$0xff] %v475
    %480 = vst [vmem:[#allocation2 + $0x58] sm:$0xff] %v476
    %481 = vrot.lane.b32.xlu0 %v405, 1
    %v482 = vpop.permute.xlu0 %481
    %483 = vrot.lane.b32.xlu0 %v406, 1
    %v484 = vpop.permute.xlu0 %483
    %485 = vrot.lane.b32.xlu0 %v407, 1
    %v486 = vpop.permute.xlu0 %485
    %487 = vrot.lane.b32.xlu0 %v408, 1
    %v488 = vpop.permute.xlu0 %487
    %v489 = vsel %vm130, %v486, %v488
    %v490 = vsel %vm130, %v484, %v486
    %v491 = vsel %vm130, %v482, %v484
    %v492 = vsel %vm130, %v488, %v482
    %v493 = vld [vmem:[%s135] sm:$0xff]
    %v494 = vld [vmem:[%s135 + $0x8] sm:$0xff]
    %v495 = vld [vmem:[%s135 + $0x10] sm:$0xff]
    %v496 = vld [vmem:[%s135 + $0x18] sm:$0xff]
    %v497 = vmul.f32 %v492, %v493
    %v498 = vmul.f32 %v491, %v494
    %v499 = vmul.f32 %v490, %v495
    %v500 = vmul.f32 %v489, %v496
    %501 = vst [vmem:[#allocation2 + $0x60] sm:$0xff] %v497
    %502 = vst [vmem:[#allocation2 + $0x68] sm:$0xff] %v498
    %503 = vst [vmem:[#allocation2 + $0x70] sm:$0xff] %v499
    %504 = vst [vmem:[#allocation2 + $0x78] sm:$0xff] %v500
    %505 = vst [vmem:[#allocation2 + $0x80] sm:$0xff] %v405
    %506 = vst [vmem:[#allocation2 + $0x88] sm:$0xff] %v406
    %507 = vst [vmem:[#allocation2 + $0x90] sm:$0xff] %v407
    %508 = vst [vmem:[#allocation2 + $0x98] sm:$0xff] %v408
    %509 = vrot.lane.b32.xlu0 %v405, 127
    %v510 = vpop.permute.xlu0 %509
    %511 = vrot.lane.b32.xlu0 %v406, 127
    %v512 = vpop.permute.xlu0 %511
    %513 = vrot.lane.b32.xlu0 %v407, 127
    %v514 = vpop.permute.xlu0 %513
    %515 = vrot.lane.b32.xlu0 %v408, 127
    %v516 = vpop.permute.xlu0 %515
    %v517 = vsel %vm160, %v514, %v516
    %v518 = vsel %vm160, %v512, %v514
    %v519 = vsel %vm160, %v510, %v512
    %v520 = vsel %vm160, %v516, %v510
    %v521 = vld [vmem:[%s165] sm:$0xff]
    %v522 = vld [vmem:[%s165 + $0x8] sm:$0xff]
    %v523 = vld [vmem:[%s165 + $0x10] sm:$0xff]
    %v524 = vld [vmem:[%s165 + $0x18] sm:$0xff]
    %v525 = vmul.f32 %v519, %v521
    %v526 = vmul.f32 %v518, %v522
    %v527 = vmul.f32 %v517, %v523
    %v528 = vmul.f32 %v520, %v524
    %529 = vst [vmem:[#allocation2 + $0xa0] sm:$0xff] %v525
    %530 = vst [vmem:[#allocation2 + $0xa8] sm:$0xff] %v526
    %531 = vst [vmem:[#allocation2 + $0xb0] sm:$0xff] %v527
    %532 = vst [vmem:[#allocation2 + $0xb8] sm:$0xff] %v528
    %533 = vrot.lane.b32.xlu0 %v405, 113
    %v534 = vpop.permute.xlu0 %533
    %535 = vrot.lane.b32.xlu0 %v406, 113
    %v536 = vpop.permute.xlu0 %535
    %537 = vrot.lane.b32.xlu0 %v407, 113
    %v538 = vpop.permute.xlu0 %537
    %539 = vrot.lane.b32.xlu0 %v408, 113
    %v540 = vpop.permute.xlu0 %539
    %v541 = vsel %vm186, %v538, %v540
    %v542 = vsel %vm186, %v536, %v538
    %v543 = vsel %vm186, %v534, %v536
    %v544 = vsel %vm186, %v540, %v534
    %v545 = vld [vmem:[%s191] sm:$0xff]
    %v546 = vld [vmem:[%s191 + $0x8] sm:$0xff]
    %v547 = vld [vmem:[%s191 + $0x10] sm:$0xff]
    %v548 = vld [vmem:[%s191 + $0x18] sm:$0xff]
    %v549 = vmul.f32 %v543, %v545
    %v550 = vmul.f32 %v542, %v546
    %v551 = vmul.f32 %v541, %v547
    %v552 = vmul.f32 %v544, %v548
    %553 = vst [vmem:[#allocation2 + $0xc0] sm:$0xff] %v549
    %554 = vst [vmem:[#allocation2 + $0xc8] sm:$0xff] %v550
    %555 = vst [vmem:[#allocation2 + $0xd0] sm:$0xff] %v551
    %556 = vst [vmem:[#allocation2 + $0xd8] sm:$0xff] %v552
    %557 = vrot.lane.b32.xlu0 %v405, 112
    %v558 = vpop.permute.xlu0 %557
    %559 = vrot.lane.b32.xlu0 %v406, 112
    %v560 = vpop.permute.xlu0 %559
    %561 = vrot.lane.b32.xlu0 %v407, 112
    %v562 = vpop.permute.xlu0 %561
    %563 = vrot.lane.b32.xlu0 %v408, 112
    %v564 = vpop.permute.xlu0 %563
    %v565 = vsel %vm212, %v562, %v564
    %v566 = vsel %vm212, %v560, %v562
    %v567 = vsel %vm212, %v558, %v560
    %v568 = vsel %vm212, %v564, %v558
    %v569 = vld [vmem:[%s217] sm:$0xff]
    %v570 = vld [vmem:[%s217 + $0x8] sm:$0xff]
    %v571 = vld [vmem:[%s217 + $0x10] sm:$0xff]
    %v572 = vld [vmem:[%s217 + $0x18] sm:$0xff]
    %v573 = vmul.f32 %v567, %v569
    %v574 = vmul.f32 %v566, %v570
    %v575 = vmul.f32 %v565, %v571
    %v576 = vmul.f32 %v568, %v572
    %577 = vst [vmem:[#allocation2 + $0xe0] sm:$0xff] %v573
    %578 = vst [vmem:[#allocation2 + $0xe8] sm:$0xff] %v574
    %579 = vst [vmem:[#allocation2 + $0xf0] sm:$0xff] %v575
    %580 = vst [vmem:[#allocation2 + $0xf8] sm:$0xff] %v576
    %581 = vrot.lane.b32.xlu0 %v405, 111
    %v582 = vpop.permute.xlu0 %581
    %583 = vrot.lane.b32.xlu0 %v406, 111
    %v584 = vpop.permute.xlu0 %583
    %585 = vrot.lane.b32.xlu0 %v407, 111
    %v586 = vpop.permute.xlu0 %585
    %587 = vrot.lane.b32.xlu0 %v408, 111
    %v588 = vpop.permute.xlu0 %587
    %v589 = vsel %vm238, %v586, %v588
    %v590 = vsel %vm238, %v584, %v586
    %v591 = vsel %vm238, %v582, %v584
    %v592 = vsel %vm238, %v588, %v582
    %v593 = vld [vmem:[%s243] sm:$0xff]
    %v594 = vld [vmem:[%s243 + $0x8] sm:$0xff]
    %v595 = vld [vmem:[%s243 + $0x10] sm:$0xff]
    %v596 = vld [vmem:[%s243 + $0x18] sm:$0xff]
    %v597 = vmul.f32 %v591, %v593
    %v598 = vmul.f32 %v590, %v594
    %v599 = vmul.f32 %v589, %v595
    %v600 = vmul.f32 %v592, %v596
    %601 = vst [vmem:[#allocation2 + $0x100] sm:$0xff] %v597
    %602 = vst [vmem:[#allocation2 + $0x108] sm:$0xff] %v598
    %603 = vst [vmem:[#allocation2 + $0x110] sm:$0xff] %v599
    %604 = vst [vmem:[#allocation2 + $0x118] sm:$0xff] %v600
    %v605 = vld [vmem:[%s2] sm:$0xff]
    %v606 = vld [vmem:[#allocation2] sm:$0xff]
    %v607 = vld [vmem:[#allocation2 + $0x8] sm:$0xff]
    %v608 = vld [vmem:[#allocation2 + $0x10] sm:$0xff]
    %v609 = vld [vmem:[#allocation2 + $0x18] sm:$0xff]
    %v610 = vld [vmem:[#allocation2 + $0x20] sm:$0xff]
    %v611 = vld [vmem:[#allocation2 + $0x28] sm:$0xff]
    %v612 = vld [vmem:[#allocation2 + $0x30] sm:$0xff]
    %v613 = vld [vmem:[#allocation2 + $0x38] sm:$0xff]
    %v614 = vld [vmem:[#allocation2 + $0x40] sm:$0xff]
    %v615 = vld [vmem:[#allocation2 + $0x48] sm:$0xff]
    %v616 = vld [vmem:[#allocation2 + $0x50] sm:$0xff]
    %v617 = vld [vmem:[#allocation2 + $0x58] sm:$0xff]
    %v618 = vld [vmem:[#allocation2 + $0x60] sm:$0xff]
    %v619 = vld [vmem:[#allocation2 + $0x68] sm:$0xff]
    %v620 = vld [vmem:[#allocation2 + $0x70] sm:$0xff]
    %v621 = vld [vmem:[#allocation2 + $0x78] sm:$0xff]
    %v622 = vld [vmem:[#allocation2 + $0x80] sm:$0xff]
    %v623 = vld [vmem:[#allocation2 + $0x88] sm:$0xff]
    %v624 = vld [vmem:[#allocation2 + $0x90] sm:$0xff]
    %v625 = vld [vmem:[#allocation2 + $0x98] sm:$0xff]
    %v626 = vld [vmem:[#allocation2 + $0xa0] sm:$0xff]
    %v627 = vld [vmem:[#allocation2 + $0xa8] sm:$0xff]
    %v628 = vld [vmem:[#allocation2 + $0xb0] sm:$0xff]
    %v629 = vld [vmem:[#allocation2 + $0xb8] sm:$0xff]
    %v630 = vld [vmem:[#allocation2 + $0xc0] sm:$0xff]
    %v631 = vld [vmem:[#allocation2 + $0xc8] sm:$0xff]
    %v632 = vld [vmem:[#allocation2 + $0xd0] sm:$0xff]
    %v633 = vld [vmem:[#allocation2 + $0xd8] sm:$0xff]
    %v634 = vld [vmem:[#allocation2 + $0xe0] sm:$0xff]
    %v635 = vld [vmem:[#allocation2 + $0xe8] sm:$0xff]
    %v636 = vld [vmem:[#allocation2 + $0xf0] sm:$0xff]
    %v637 = vld [vmem:[#allocation2 + $0xf8] sm:$0xff]
    %v638 = vld [vmem:[#allocation2 + $0x100] sm:$0xff]
    %v639 = vld [vmem:[#allocation2 + $0x108] sm:$0xff]
    %v640 = vld [vmem:[#allocation2 + $0x110] sm:$0xff]
    %v641 = vld [vmem:[#allocation2 + $0x118] sm:$0xff]
    %v642 = vld [vmem:[%s4] sm:$0xff]
    %644 = vset.pattern.permute.xlu0 0
    %645 = vperm.xlu0 %644, %v642
    %v646 = vpop.permute.xlu0 %645
    %v649 = vsel %vm306, %v605, 0
    %651 = vmatpush.msra.mxu0 0.0
    %652 = vmatpush.msra.mxu0 0.0
    %653 = vmatpush.msra.mxu0 0.0
    %654 = vmatpush.msra.mxu0 0.0
    %655 = vmatpush.msra.mxu0 0.0
    %656 = vmatpush.msra.mxu0 0.0
    %657 = vmatpush.msra.mxu0 0.0
    %658 = vmatpush.msra.mxu0 %v638
    %659 = vmatpush.msra.mxu0 %v634
    %660 = vmatpush.msra.mxu0 %v630
    %661 = vmatpush.msra.mxu0 %v626
    %662 = vmatpush.msra.mxu0 %v622
    %663 = vmatpush.msra.mxu0 %v618
    %664 = vmatpush.msra.mxu0 %v614
    %665 = vmatpush.msra.mxu0 %v610
    %666 = vmatpush.msra.mxu0 %v606
    %667 = vmatmul.f32.gmra.mxu0 %v649
    %v668 = vpop.f32.mrf.mxu0
    %v669 = vadd.f32 %v646, %v668
    %670 = vdwg.mxu0
    %671 = vmatpush.msra.mxu0 0.0
    %672 = vmatpush.msra.mxu0 0.0
    %673 = vmatpush.msra.mxu0 0.0
    %674 = vmatpush.msra.mxu0 0.0
    %675 = vmatpush.msra.mxu0 0.0
    %676 = vmatpush.msra.mxu0 0.0
    %677 = vmatpush.msra.mxu0 0.0
    %678 = vmatpush.msra.mxu0 %v639
    %679 = vmatpush.msra.mxu0 %v635
    %680 = vmatpush.msra.mxu0 %v631
    %681 = vmatpush.msra.mxu0 %v627
    %682 = vmatpush.msra.mxu0 %v623
    %683 = vmatpush.msra.mxu0 %v619
    %684 = vmatpush.msra.mxu0 %v615
    %685 = vmatpush.msra.mxu0 %v611
    %686 = vmatpush.msra.mxu0 %v607
    %687 = vmatmul.f32.gmra.mxu0 %v649
    %v688 = vpop.f32.mrf.mxu0
    %v689 = vadd.f32 %v646, %v688
    %690 = vdwg.mxu0
    %691 = vmatpush.msra.mxu0 0.0
    %692 = vmatpush.msra.mxu0 0.0
    %693 = vmatpush.msra.mxu0 0.0
    %694 = vmatpush.msra.mxu0 0.0
    %695 = vmatpush.msra.mxu0 0.0
    %696 = vmatpush.msra.mxu0 0.0
    %697 = vmatpush.msra.mxu0 0.0
    %698 = vmatpush.msra.mxu0 %v640
    %699 = vmatpush.msra.mxu0 %v636
    %700 = vmatpush.msra.mxu0 %v632
    %701 = vmatpush.msra.mxu0 %v628
    %702 = vmatpush.msra.mxu0 %v624
    %703 = vmatpush.msra.mxu0 %v620
    %704 = vmatpush.msra.mxu0 %v616
    %705 = vmatpush.msra.mxu0 %v612
    %706 = vmatpush.msra.mxu0 %v608
    %707 = vmatmul.f32.gmra.mxu0 %v649
    %v708 = vpop.f32.mrf.mxu0
    %v709 = vadd.f32 %v646, %v708
    %710 = vdwg.mxu0
    %711 = vmatpush.msra.mxu0 0.0
    %712 = vmatpush.msra.mxu0 0.0
    %713 = vmatpush.msra.mxu0 0.0
    %714 = vmatpush.msra.mxu0 0.0
    %715 = vmatpush.msra.mxu0 0.0
    %716 = vmatpush.msra.mxu0 0.0
    %717 = vmatpush.msra.mxu0 0.0
    %718 = vmatpush.msra.mxu0 %v641
    %719 = vmatpush.msra.mxu0 %v637
    %720 = vmatpush.msra.mxu0 %v633
    %721 = vmatpush.msra.mxu0 %v629
    %722 = vmatpush.msra.mxu0 %v625
    %723 = vmatpush.msra.mxu0 %v621
    %724 = vmatpush.msra.mxu0 %v617
    %725 = vmatpush.msra.mxu0 %v613
    %726 = vmatpush.msra.mxu0 %v609
    %727 = vmatmul.f32.gmra.mxu0 %v649
    %v728 = vpop.f32.mrf.mxu0
    %v729 = vadd.f32 %v646, %v728
    %730 = vdwg.mxu0
    %v731 = vadd.f32 %v669, %v334
    %v732 = vadd.f32 %v689, %v357
    %v733 = vadd.f32 %v709, %v380
    %v734 = vadd.f32 %v729, %v403
    %v735 = vmax.f32 %v731, 0.0
    %v736 = vmax.f32 %v732, 0.0
    %v737 = vmax.f32 %v733, 0.0
    %v738 = vmax.f32 %v734, 0.0
    %739 = vst [vmem:[%s6] sm:$0xff] %v735
    %740 = vst [vmem:[%s6 + $0x8] sm:$0xff] %v736
    %741 = vst [vmem:[%s6 + $0x10] sm:$0xff] %v737
    %742 = vst [vmem:[%s6 + $0x18] sm:$0xff] %v738
    // Predicated region
    $region30: #{forward.1} parent=1 // pred_check
      _
    $region31: #{forward.1} parent=1 // pred_check_branch
      %744 = sbr.rel (0) target = $region33
    $region32: #{forward.1} parent=1 // pred_region
      _
    $region33: #{forward.1} parent=1 // pred_fallthru
      _
    // Predicated region
    $region34: #{forward.1} parent=1 // pred_check
      _
    $region35: #{forward.1} parent=1 // pred_check_branch
      %746 = sbr.rel (0) target = $region37
    $region36: #{forward.1} parent=1 // pred_region
      _
    $region37: #{forward.1} parent=1 // pred_fallthru
      _
    %747 = vsyncpa [#allocation4], 1

</llo_original>
